<compile_context>
chip_gen: v5e
topology: v5e:2x2
jax: 0.10.0
libtpu: 0.0.40
codegen_flags: <defaults>
</compile_context>

<pallas_src>
import jax
import jax.numpy as jnp
from jax.experimental import pallas as pl
from jax.experimental.pallas import tpu as pltpu


def _round_up(x, m):
    return (x + m - 1) // m * m


# --------------------- pass 1: BN batch statistics (reduction) ---------------------

def conv_stats_kernel(p_ref, w_ref, s_ref):
    """Accumulate per-channel sum / sum-of-squares of the (bias-free) conv output.

    p_ref: (TM, Kp) bf16 im2col rows    w_ref: (Kp, OCp) bf16
    s_ref: (2, OCp) f32 accumulator; row 0 = sum, row 1 = sum of squares.
    """
    @pl.when(pl.program_id(0) == 0)
    def _init():
        s_ref[...] = jnp.zeros_like(s_ref)

    y = jnp.dot(p_ref[...], w_ref[...], preferred_element_type=jnp.float32)
    s_ref[0:1, :] += jnp.sum(y, axis=0, keepdims=True)
    s_ref[1:2, :] += jnp.sum(y * y, axis=0, keepdims=True)


# --------------- pass 2: conv GEMM + fused BN + ReLU + 2x2 max-pool -----------------

def conv_bn_relu_pool_kernel(p_ref, w_ref, scale_ref, shift_ref, o_ref):
    """p_ref: (4, TM, Kp) bf16 — the 4 leading slices are the im2col rows of the four
    conv positions inside each 2x2 pooling window, for TM pooled output positions.
    o_ref: (TM, OCp) f32 pooled output (lane-dense full-width stores)."""
    w = w_ref[...]
    scale = scale_ref[...]
    shift = shift_ref[...]
    # BN scale/shift must be applied before the max (scale may be negative); ReLU is
    # monotone, so it commutes with the max and is applied once at the end.
    acc = jnp.dot(p_ref[0], w, preferred_element_type=jnp.float32) * scale + shift
    for j in range(1, 4):  # static 4-tap pooling window (2x2)
        yj = jnp.dot(p_ref[j], w, preferred_element_type=jnp.float32) * scale + shift
        acc = jnp.maximum(acc, yj)
    o_ref[...] = jnp.maximum(acc, 0.0)


# ----------------------------------- wrapper ----------------------------------------

def conv_block_forward(x_nchw, w_oihw, b, gamma, beta, eps=1e-5, *, tile_rows=256):
    """Forward of Conv2d(k=3, valid) -> BatchNorm2d(train stats) -> ReLU -> MaxPool2d(2,2).

    `b` (conv bias) is accepted for API parity but unused: train-mode BN's batch-mean
    subtraction cancels a per-channel constant exactly.
    TODO(synk): running_mean / running_var buffer updates (in-place training side
    effect) are not materialized; they do not affect the forward output.
    """
    del b
    n, c, h, w = x_nchw.shape
    oc, _, kh, kw = w_oihw.shape
    oh, ow = h - kh + 1, w - kw + 1
    ph, pw = oh // 2, ow // 2

    kk = kh * kw * c
    kp = _round_up(kk, 8)                   # sublane-aligned contraction dim
    ocp = _round_up(max(oc, 128), 128)      # lane-dense output channels

    # ---- glue: NCHW -> NHWC, im2col (channel minor), zero-pad K, cast to bf16 ----
    # TODO(synk): in-kernel im2col (9 shifted (rows,C)x(C,OC) GEMMs from an NHWC tile)
    # would avoid materializing the ~9x-expanded patches array in HBM.
    x = jnp.transpose(x_nchw, (0, 2, 3, 1)).astype(jnp.float32)
    taps = [x[:, ky:ky + oh, kx:kx + ow, :] for ky in range(kh) for kx in range(kw)]
    patches4 = jnp.concatenate(taps, axis=-1)                        # (N, OH, OW, KK)
    patches4 = jnp.pad(patches4, ((0, 0), (0, 0), (0, 0), (0, kp - kk)))
    patches4 = patches4.astype(jnp.bfloat16)

    # weights (OC, C, KH, KW) -> (KH, KW, C, OC) -> (Kp, OCp), zero-padded, bf16
    w2d = jnp.transpose(w_oihw, (2, 3, 1, 0)).reshape(kk, oc).astype(jnp.float32)
    w2d = jnp.pad(w2d, ((0, kp - kk), (0, ocp - oc))).astype(jnp.bfloat16)

    vmem_limit = 32 * 1024 * 1024

    # ---- pass 1: per-channel statistics over ALL N*OH*OW conv output positions ----
    m = n * oh * ow
    tm_s = _round_up(min(tile_rows, m), 16)
    m_pad = _round_up(m, tm_s)
    patches_flat = jnp.pad(patches4.reshape(m, kp), ((0, m_pad - m), (0, 0)))

    stats = pl.pallas_call(
        conv_stats_kernel,
        out_shape=jax.ShapeDtypeStruct((2, ocp), jnp.float32),
        grid_spec=pltpu.PrefetchScalarGridSpec(
            num_scalar_prefetch=0,
            grid=(m_pad // tm_s,),
            in_specs=[pl.BlockSpec((tm_s, kp), lambda i: (i, 0)),
                      pl.BlockSpec((kp, ocp), lambda i: (0, 0))],
            out_specs=pl.BlockSpec((2, ocp), lambda i: (0, 0)),
        ),
        compiler_params=pltpu.CompilerParams(
            dimension_semantics=("arbitrary",),    # reduction into resident accumulator
            vmem_limit_bytes=vmem_limit),
    )(patches_flat, w2d)

    # Tiny per-channel math stays in plain JAX. Zero-padded rows contribute 0 to both
    # sums, so dividing by the true count keeps the statistics exact.
    mean = stats[0] / m
    var = jnp.maximum(stats[1] / m - mean * mean, 0.0)
    gamma_p = jnp.pad(gamma.astype(jnp.float32), (0, ocp - oc))
    beta_p = jnp.pad(beta.astype(jnp.float32), (0, ocp - oc))
    scale = gamma_p * jax.lax.rsqrt(var + eps)
    shift = beta_p - mean * scale

    # ---- pass 2: conv GEMM + BN + ReLU + 2x2 max-pool over pooled positions ----
    # Fold the pool into the layout: stack the im2col rows of the 4 positions of each
    # pooling window so the kernel pools with an elementwise max of 4 GEMM outputs.
    m_pool = n * ph * pw
    pool_taps = [patches4[:, dy:2 * ph:2, dx:2 * pw:2, :].reshape(m_pool, kp)
                 for dy in range(2) for dx in range(2)]
    tm = _round_up(min(tile_rows, m_pool), 16)
    m_pool_pad = _round_up(m_pool, tm)
    pool_patches = jnp.pad(jnp.stack(pool_taps, axis=0),
                           ((0, 0), (0, m_pool_pad - m_pool), (0, 0)))

    pooled = pl.pallas_call(
        conv_bn_relu_pool_kernel,
        out_shape=jax.ShapeDtypeStruct((m_pool_pad, ocp), jnp.float32),
        grid_spec=pltpu.PrefetchScalarGridSpec(
            num_scalar_prefetch=0,
            grid=(m_pool_pad // tm,),
            in_specs=[pl.BlockSpec((4, tm, kp), lambda i: (0, i, 0)),
                      pl.BlockSpec((kp, ocp), lambda i: (0, 0)),
                      pl.BlockSpec((1, ocp), lambda i: (0, 0)),
                      pl.BlockSpec((1, ocp), lambda i: (0, 0))],
            out_specs=pl.BlockSpec((tm, ocp), lambda i: (i, 0)),
        ),
        compiler_params=pltpu.CompilerParams(
            dimension_semantics=("parallel",),     # independent tiles -> megacore shard
            vmem_limit_bytes=vmem_limit),
    )(pool_patches, w2d, scale.reshape(1, ocp), shift.reshape(1, ocp))

    # glue: (M_pool, OCp) -> (N, PH, PW, OC) -> NCHW
    out = pooled[:m_pool, :oc].reshape(n, ph, pw, oc)
    return jnp.transpose(out, (0, 3, 1, 2))


def conv_block_reference(x, w, b, gamma, beta, eps=1e-5):
    y = jax.lax.conv_general_dilated(
        x, w, window_strides=(1, 1), padding="VALID",
        dimension_numbers=("NCHW", "OIHW", "NCHW"))
    y = y + b[None, :, None, None]
    mean = y.mean(axis=(0, 2, 3), keepdims=True)
    var = ((y - mean) ** 2).mean(axis=(0, 2, 3), keepdims=True)
    y = (y - mean) * jax.lax.rsqrt(var + eps)
    y = y * gamma[None, :, None, None] + beta[None, :, None, None]
    y = jnp.maximum(y, 0.0)
    nn_, c_, hh, ww = y.shape
    y = y[:, :, : hh // 2 * 2, : ww // 2 * 2].reshape(nn_, c_, hh // 2, 2, ww // 2, 2)
    return y.max(axis=(3, 5))


if __name__ == "__main__":
    key = jax.random.PRNGKey(0)
    k_x, k_w, k_b, k_g, k_be = jax.random.split(key, 5)

    N, C_IN, C_OUT, H, W = 2, 4, 8, 16, 16
    x = jax.random.normal(k_x, (N, C_IN, H, W), dtype=jnp.float32)
    conv_w = 0.1 * jax.random.normal(k_w, (C_OUT, C_IN, 3, 3), dtype=jnp.float32)
    conv_b = 0.1 * jax.random.normal(k_b, (C_OUT,), dtype=jnp.float32)
    bn_gamma = 1.0 + 0.1 * jax.random.normal(k_g, (C_OUT,), dtype=jnp.float32)
    bn_beta = 0.1 * jax.random.normal(k_be, (C_OUT,), dtype=jnp.float32)

    # tile_rows=64 so the toy shape exercises multi-step grids in both passes.
    out = conv_block_forward(x, conv_w, conv_b, bn_gamma, bn_beta, tile_rows=64)
    out = jax.block_until_ready(out)

    ref = conv_block_reference(x, conv_w, conv_b, bn_gamma, bn_beta)
    assert out.shape == (N, C_OUT, (H - 2) // 2, (W - 2) // 2), out.shape
    # bf16 GEMM with f32 accumulation -> slightly looser tolerance than pure f32.
    assert jnp.allclose(out, ref, rtol=2e-2, atol=2e-2), "mismatch vs reference"

    print("KERNEL_OK")
</pallas_src>

<mosaic_0001>
module attributes {stable_mosaic.version = 11 : i64} {
  func.func @conv_stats_kernel(%arg0: i32, %arg1: memref<64x40xbf16, #tpu.memory_space<vmem>>, %arg2: memref<40x128xbf16, #tpu.memory_space<vmem>>, %arg3: memref<2x128xf32, #tpu.memory_space<vmem>>) attributes {dimension_semantics = [#tpu.dimension_semantics<arbitrary>], iteration_bounds = array<i64: 7>, scalar_prefetch = 0 : i64, scratch_operands = 0 : i64, tpu.core_type = #tpu.core_type<tc>, window_params = [{transform_indices = @transform_0, window_bounds = array<i64: 64, 40>}, {pipeline_mode = #tpu.pipeline_mode<synchronous>, transform_indices = @transform_1, window_bounds = array<i64: 40, 128>}, {pipeline_mode = #tpu.pipeline_mode<synchronous>, transform_indices = @transform_2, window_bounds = array<i64: 2, 128>}]} {
    %c0_i32 = arith.constant 0 : i32
    %0 = arith.cmpi eq, %arg0, %c0_i32 : i32
    %1 = arith.extui %0 : i1 to i32
    %c0_i32_0 = arith.constant 0 : i32
    %2 = arith.cmpi ne, %1, %c0_i32_0 : i32
    scf.if %2 {
      %cst_13 = arith.constant 0.000000e+00 : f32
      %17 = vector.broadcast %cst_13 : f32 to vector<2x128xf32>
      %c0_14 = arith.constant 0 : index
      %c0_15 = arith.constant 0 : index
      %18 = vector.load %arg3[%c0_14, %c0_15] : memref<2x128xf32, #tpu.memory_space<vmem>>, vector<2x128xf32>
      tpu.vector_store %arg3[%c0_14, %c0_15], %17 {strides = array<i32>} : memref<2x128xf32, #tpu.memory_space<vmem>>, vector<2x128xf32>,
    } else {
    }
    %c0 = arith.constant 0 : index
    %c0_1 = arith.constant 0 : index
    %3 = vector.load %arg1[%c0, %c0_1] : memref<64x40xbf16, #tpu.memory_space<vmem>>, vector<64x40xbf16>
    %c0_2 = arith.constant 0 : index
    %c0_3 = arith.constant 0 : index
    %4 = vector.load %arg2[%c0_2, %c0_3] : memref<40x128xbf16, #tpu.memory_space<vmem>>, vector<40x128xbf16>
    %cst = arith.constant dense<0.000000e+00> : vector<64x128xf32>
    %5 = tpu.matmul %3, %4, %cst {dimension_numbers = #tpu.dot_dimension_numbers<[1], [0], [0], [1], [0, 0, 1, 1], [], []>} : vector<64x40xbf16>, vector<40x128xbf16>, vector<64x128xf32> -> vector<64x128xf32>
    %c0_4 = arith.constant 0 : index
    %c0_5 = arith.constant 0 : index
    %6 = vector.load %arg3[%c0_4, %c0_5] : memref<2x128xf32, #tpu.memory_space<vmem>>, vector<1x128xf32>
    %cst_6 = arith.constant dense<0.000000e+00> : vector<128xf32>
    %7 = vector.multi_reduction <add>, %5, %cst_6 [0] : vector<64x128xf32> to vector<128xf32>
    %8 = vector.shape_cast %7 : vector<128xf32> to vector<1x128xf32>
    %9 = arith.addf %6, %8 : vector<1x128xf32>
    %c0_7 = arith.constant 0 : index
    %c0_8 = arith.constant 0 : index
    %10 = vector.load %arg3[%c0_7, %c0_8] : memref<2x128xf32, #tpu.memory_space<vmem>>, vector<1x128xf32>
    tpu.vector_store %arg3[%c0_7, %c0_8], %9 {strides = array<i32>} : memref<2x128xf32, #tpu.memory_space<vmem>>, vector<1x128xf32>,
    %c1 = arith.constant 1 : index
    %c0_9 = arith.constant 0 : index
    %11 = vector.load %arg3[%c1, %c0_9] : memref<2x128xf32, #tpu.memory_space<vmem>>, vector<1x128xf32>
    %12 = arith.mulf %5, %5 : vector<64x128xf32>
    %cst_10 = arith.constant dense<0.000000e+00> : vector<128xf32>
    %13 = vector.multi_reduction <add>, %12, %cst_10 [0] : vector<64x128xf32> to vector<128xf32>
    %14 = vector.shape_cast %13 : vector<128xf32> to vector<1x128xf32>
    %15 = arith.addf %11, %14 : vector<1x128xf32>
    %c1_11 = arith.constant 1 : index
    %c0_12 = arith.constant 0 : index
    %16 = vector.load %arg3[%c1_11, %c0_12] : memref<2x128xf32, #tpu.memory_space<vmem>>, vector<1x128xf32>
    tpu.vector_store %arg3[%c1_11, %c0_12], %15 {strides = array<i32>} : memref<2x128xf32, #tpu.memory_space<vmem>>, vector<1x128xf32>,
    return
  }
  func.func @transform_0(%arg0: i32) -> (i32, i32) {
    %c0_i32 = arith.constant 0 : i32
    %c0_i32_0 = arith.constant 0 : i32
    return %arg0, %c0_i32 : i32, i32
  }
  func.func @transform_1(%arg0: i32) -> (i32, i32) {
    %c0_i32 = arith.constant 0 : i32
    %c0_i32_0 = arith.constant 0 : i32
    %c0_i32_1 = arith.constant 0 : i32
    return %c0_i32, %c0_i32_0 : i32, i32
  }
  func.func @transform_2(%arg0: i32) -> (i32, i32) {
    %c0_i32 = arith.constant 0 : i32
    %c0_i32_0 = arith.constant 0 : i32
    %c0_i32_1 = arith.constant 0 : i32
    return %c0_i32, %c0_i32_0 : i32, i32
  }
}

</mosaic_0001>

<llo_original>
// kernel: tpu_custom_call.1
$region0: #{tpu_custom_call.1}
  #allocation0 [shape = 'u32[]', space=smem, size = 0x4, offset = 0x4, fixed_abs, tag = 'smem constant byte address 0x4 - core index']
  #allocation1 [shape = 'u32[72,128]{1,0:T(1,128)}', space=vmem, size = 0x9000, scoped, tag = 'internal scratch']
  %s0 = inlined_call_operand.vmem [shape: bf16[448,40], index: 0, kind: input, shape index: {}]
  %s1 = inlined_call_operand.vmem [shape: bf16[40,128], index: 1, kind: input, shape index: {}]
  %s2 = inlined_call_operand.hbm [shape: f32[2,128], index: 2, kind: output, shape index: {}]
  %s3 = sld [smem:[#allocation0]]
  $region45: #{tpu_custom_call.1} parent=0
    _
  %s5 = ssub.s32 1, %s3
  %s6 = scalar_select 0, %s5, %s3
  $region1: #{tpu_custom_call.1} parent=0
    #allocation2 [shape = 'u8[1024]{0}', space=vmem, size = 0x400, scoped, tag = 'output window, operand 0, single buffered']
    #allocation3 [shape = 's32[2]{0}', space=sflag, size = 0x8, scoped, tag = 'scoped memory for tpu_custom_call.1']
    %7 = vsyncpa [#allocation3], 0
    loop: start=0, step=1, limit=9
    $region2: #{tpu_custom_call.1} parent=1 // loop_pre_header
      _
    $region3: #{tpu_custom_call.1} parent=1 // loop_header
      %s9 = sphi 0, %s13
      %p10 = scmp.ge.s32.totalorder %s9, 9
      %s19 = sphi 0, %s21
      %s22 = sphi 0, %s19
      %s23 = sphi 0, %s22
      %s39 = sphi 0, %s23
      %s43 = sphi 0, %s43
      %s45 = sphi 0, %s43
      %s46 = sphi 0, %s45
      %s60 = sphi 0, %s46
      %s64 = sphi 0, %s64
      %s66 = sphi 0, %s64
      %s67 = sphi 0, %s66
      %s81 = sphi 0, %s67
    $region4: #{tpu_custom_call.1} parent=1 // loop_header_branch
      %12 = sbr.rel (%p10) target = $region8
    $region5: #{tpu_custom_call.1} parent=1 // loop_body
      %s14 = ssub.s32 %s9, 1
      %s15 = ssub.s32 %s9, 2
      %s16 = sadd.s32 %s9, 1
      %s17 = ssub.s32 %s9, %s16
      %p18 = scmp.eq.s32.totalorder %s17, 0
      %s20 = sadd.s32 %s19, 1
      %s21 = scalar_select %p18, %s19, %s20
      %p24 = pneg %p18
      %p25 = scmp.eq.s32.totalorder %s9, 6
      %p26 = por %p24, %p25
      %p27 = scmp.ne.s32.totalorder %s19, %s22
      %p28 = scmp.eq.s32.totalorder %s9, 0
      %p29 = por %p27, %p28
      %p30 = scmp.ne.s32.totalorder %s19, %s22
      %p31 = scmp.eq.s32.totalorder %s14, 6
      %p32 = por %p30, %p31
      %p33 = scmp.ne.s32.totalorder %s22, %s23
      %p34 = scmp.eq.s32.totalorder %s14, 0
      %p35 = por %p33, %p34
      %p36 = scmp.ne.s32.totalorder %s22, %s23
      %p37 = scmp.eq.s32.totalorder %s15, 6
      %p38 = por %p36, %p37
      %p40 = scmp.ne.s32.totalorder %s23, %s39
      %p41 = scmp.eq.s32.totalorder %s15, 0
      %p42 = por %p40, %p41
      %s44 = sadd.s32 %s43, 1
      %p47 = scmp.eq.s32.totalorder %s9, 6
      %p48 = scmp.ne.s32.totalorder %s43, %s45
      %p49 = scmp.eq.s32.totalorder %s9, 0
      %p50 = por %p48, %p49
      %p51 = scmp.ne.s32.totalorder %s43, %s45
      %p52 = scmp.eq.s32.totalorder %s14, 6
      %p53 = por %p51, %p52
      %p54 = scmp.ne.s32.totalorder %s45, %s46
      %p55 = scmp.eq.s32.totalorder %s14, 0
      %p56 = por %p54, %p55
      %p57 = scmp.ne.s32.totalorder %s45, %s46
      %p58 = scmp.eq.s32.totalorder %s15, 6
      %p59 = por %p57, %p58
      %p61 = scmp.ne.s32.totalorder %s46, %s60
      %p62 = scmp.eq.s32.totalorder %s15, 0
      %p63 = por %p61, %p62
      %s65 = sadd.s32 %s64, 1
      %p68 = scmp.eq.s32.totalorder %s9, 6
      %p69 = scmp.ne.s32.totalorder %s64, %s66
      %p70 = scmp.eq.s32.totalorder %s9, 0
      %p71 = por %p69, %p70
      %p72 = scmp.ne.s32.totalorder %s64, %s66
      %p73 = scmp.eq.s32.totalorder %s14, 6
      %p74 = por %p72, %p73
      %p75 = scmp.ne.s32.totalorder %s66, %s67
      %p76 = scmp.eq.s32.totalorder %s14, 0
      %p77 = por %p75, %p76
      %p78 = scmp.ne.s32.totalorder %s66, %s67
      %p79 = scmp.eq.s32.totalorder %s15, 6
      %p80 = por %p78, %p79
      %p82 = scmp.ne.s32.totalorder %s67, %s81
      %p83 = scmp.eq.s32.totalorder %s15, 0
      %p84 = por %p82, %p83
      %p85 = scmp.le.s32.totalorder 1, %s9
      %p86 = scmp.lt.s32.totalorder %s9, 8
      %p87 = pnand %p85, %p86
      %p88 = pneg %p87
      // Predicated region
      $region9: #{tpu_custom_call.1} parent=5 // pred_check
        _
      $region10: #{tpu_custom_call.1} parent=5 // pred_check_branch
        %90 = sbr.rel (%p87) target = $region12
      $region11: #{tpu_custom_call.1} parent=5 // pred_region
        %s91 = ssub.s32 %s9, 1
        // Predicated region
        $region13: #{tpu_custom_call.1} parent=11 // pred_check
          %p92 = pneg %p56
        $region14: #{tpu_custom_call.1} parent=11 // pred_check_branch
          %94 = sbr.rel (%p92) target = $region16
        $region15: #{tpu_custom_call.1} parent=11 // pred_region
          _
        $region16: #{tpu_custom_call.1} parent=11 // pred_fallthru
          _
      $region12: #{tpu_custom_call.1} parent=5 // pred_fallthru
        _
      %p95 = scmp.lt.s32.totalorder %s9, 7
      // Predicated region
      $region17: #{tpu_custom_call.1} parent=5 // pred_check
        %p96 = pneg %p95
      $region18: #{tpu_custom_call.1} parent=5 // pred_check_branch
        %98 = sbr.rel (%p96) target = $region20
      $region19: #{tpu_custom_call.1} parent=5 // pred_region
        // Predicated region
        $region21: #{tpu_custom_call.1} parent=19 // pred_check
          %p99 = pneg %p29
        $region22: #{tpu_custom_call.1} parent=19 // pred_check_branch
          %101 = sbr.rel (%p99) target = $region24
        $region23: #{tpu_custom_call.1} parent=19 // pred_region
          %s102 = smul.u32 8, %s9
          %p103 = scmp.lt.s32.totalorder %s102, 55
          %s104 = scalar_select %p103, %s102, 55
          %s105 = smul.addr %s104, 4
          %s106 = scalar_lea.vmem %s0, %s105
          %s107 = smul.u32 8, %s9
        $region24: #{tpu_custom_call.1} parent=19 // pred_fallthru
          _
      $region20: #{tpu_custom_call.1} parent=5 // pred_fallthru
        _
      %p108 = scmp.le.s32.totalorder 1, %s9
      %p109 = scmp.lt.s32.totalorder %s9, 8
      %p110 = pnand %p108, %p109
      %p111 = pneg %p110
      // Predicated region
      $region25: #{tpu_custom_call.1} parent=5 // pred_check
        _
      $region26: #{tpu_custom_call.1} parent=5 // pred_check_branch
        %113 = sbr.rel (%p110) target = $region28
      $region27: #{tpu_custom_call.1} parent=5 // pred_region
        %s114 = ssub.s32 %s9, 1
        %s115 = smul.u32 8, %s14
        %p116 = scmp.lt.s32.totalorder %s115, 55
        %s117 = scalar_select %p116, %s115, 55
        %s118 = smul.addr %s117, 4
        %s119 = scalar_lea.vmem %s0, %s118
        %p120 = pneg %p35
        %p121 = pneg %p32
        %p122 = pneg %p56
        %p123 = pneg %p53
        %p124 = pneg %p77
        %p125 = pneg %p74
        %s126 = smul.u32 8, %s14
        %p127 = scmp.lt.s32.totalorder %s126, 55
        %s128 = scalar_select %p127, %s126, 55
        %s129 = smul.addr %s128, 4
        %s130 = scalar_lea.vmem %s0, %s129
        %s131 = smul.u32 8, %s14
        %p133 = scmp.eq.s32.totalorder %s14, 0
        // Predicated region
        $region29: #{tpu_custom_call.1} parent=27 // pred_check
          %p134 = pneg %p133
        $region30: #{tpu_custom_call.1} parent=27 // pred_check_branch
          %136 = sbr.rel (%p134) target = $region32
        $region31: #{tpu_custom_call.1} parent=27 // pred_region
          %137 = vst [vmem:[#allocation2] sm:$0x3] 0.0
        $region32: #{tpu_custom_call.1} parent=27 // pred_fallthru
          _
        %v138 = vld [vmem:[%s130] sm:$0xf]
        %v139 = vld [vmem:[%s130 + $0x4] sm:$0xf]
        %v140 = vld [vmem:[%s130 + $0x8] sm:$0xf]
        %v141 = vld [vmem:[%s130 + $0xc] sm:$0xf]
        %v142 = vld [vmem:[%s130 + $0x10] sm:$0xf]
        %v143 = vld [vmem:[%s130 + $0x14] sm:$0xf]
        %v144 = vld [vmem:[%s130 + $0x18] sm:$0xf]
        %v145 = vld [vmem:[%s130 + $0x1c] sm:$0xf]
        %v146 = vld [vmem:[%s1] sm:$0xf]
        %v147 = vld [vmem:[%s1 + $0x4] sm:$0xf]
        %v148 = vld [vmem:[%s1 + $0x8] sm:$0xf]
        %v149 = vld [vmem:[%s1 + $0xc] sm:$0xf]
        %v150 = vld [vmem:[%s1 + $0x10] sm:$0xf]
        %v159 = vunpack.c.l.b16 %v138
        %v160 = vunpack.c.l.b16 %v139
        %v161 = vunpack.c.l.b16 %v140
        %v162 = vunpack.c.l.b16 %v141
        %v163 = vunpack.c.l.b16 %v142
        %v164 = vunpack.c.l.b16 %v143
        %v165 = vunpack.c.l.b16 %v144
        %v166 = vunpack.c.l.b16 %v145
        %v167 = vpack.c.b16 %v160, %v159
        %v168 = vpack.c.b16 %v162, %v161
        %v169 = vpack.c.b16 %v164, %v163
        %v170 = vpack.c.b16 %v166, %v165
        %v176 = vunpack.c.l.b16 %v146
        %v177 = vunpack.c.l.b16 %v147
        %v178 = vunpack.c.l.b16 %v148
        %v179 = vunpack.c.l.b16 %v149
        %v180 = vunpack.c.l.b16 %v150
        %v181 = vpack.c.b16 %v177, %v176
        %v182 = vpack.c.b16 %v179, %v178
        %v183 = vpack.c.b16 %v180, %v180
        %vm186 = vcmask 326656
        %v188 = vsel %vm186, %v167, 0
        %v191 = vsel %vm186, %v168, 0
        %v194 = vsel %vm186, %v169, 0
        %v197 = vsel %vm186, %v170, 0
        %vm199 = vcmask 1043456
        %v201 = vsel %vm199, %v183, 0
        %203 = vmatpush.bf16.msra.mxu0 0
        %204 = vmatpush.bf16.msra.mxu0 0
        %205 = vmatpush.bf16.msra.mxu0 0
        %206 = vmatpush.bf16.msra.mxu0 0
        %207 = vmatpush.bf16.msra.mxu0 0
        %208 = vmatpush.bf16.msra.mxu0 %v201
        %209 = vmatpush.bf16.msra.mxu0 %v182
        %210 = vmatpush.bf16.msra.mxu0 %v181
        %211 = vmatmul.bf16.gmra.mxu0 %v188
        %v212 = vpop.f32.mrf.mxu0
        %v213 = vadd.f32 0.0, %v212
        %v214 = vpop.f32.mrf.mxu0
        %v215 = vadd.f32 0.0, %v214
        %216 = vmatmul.bf16.gmra.mxu0 %v191
        %v217 = vpop.f32.mrf.mxu0
        %v218 = vadd.f32 0.0, %v217
        %v219 = vpop.f32.mrf.mxu0
        %v220 = vadd.f32 0.0, %v219
        %221 = vmatmul.bf16.gmra.mxu0 %v194
        %v222 = vpop.f32.mrf.mxu0
        %v223 = vadd.f32 0.0, %v222
        %v224 = vpop.f32.mrf.mxu0
        %v225 = vadd.f32 0.0, %v224
        %226 = vmatmul.bf16.gmra.mxu0 %v197
        %v227 = vpop.f32.mrf.mxu0
        %v228 = vadd.f32 0.0, %v227
        %v229 = vpop.f32.mrf.mxu0
        %v230 = vadd.f32 0.0, %v229
        %231 = vdwg.mxu0
        %v232 = vld [vmem:[#allocation2] sm:$0x1]
        %v233 = vadd.f32 %v213, %v215
        %v234 = vadd.f32 %v233, %v218
        %v235 = vadd.f32 %v234, %v220
        %v236 = vadd.f32 %v235, %v223
        %v237 = vadd.f32 %v236, %v225
        %v238 = vadd.f32 %v237, %v228
        %v239 = vadd.f32 %v238, %v230
        %v240 = vrot.slane %v239, 4
        %v241 = vadd.f32 %v239, %v240
        %v242 = vrot.slane %v241, 2
        %v243 = vadd.f32 %v241, %v242
        %v244 = vrot.slane %v243, 1
        %v245 = vadd.f32 %v243, %v244
        %v246 = vadd.f32 %v232, %v245
        %247 = vst [vmem:[#allocation2] sm:$0x1] %v246
        %v248 = vld [vmem:[#allocation2 + $0x1] sm:$0x1]
        %v249 = vmul.f32 %v213, %v213
        %v250 = vmul.f32 %v215, %v215
        %v251 = vmul.f32 %v218, %v218
        %v252 = vmul.f32 %v220, %v220
        %v253 = vmul.f32 %v223, %v223
        %v254 = vmul.f32 %v225, %v225
        %v255 = vmul.f32 %v228, %v228
        %v256 = vmul.f32 %v230, %v230
        %v257 = vadd.f32 %v249, %v250
        %v258 = vadd.f32 %v257, %v251
        %v259 = vadd.f32 %v258, %v252
        %v260 = vadd.f32 %v259, %v253
        %v261 = vadd.f32 %v260, %v254
        %v262 = vadd.f32 %v261, %v255
        %v263 = vadd.f32 %v262, %v256
        %v264 = vrot.slane %v263, 4
        %v265 = vadd.f32 %v263, %v264
        %v266 = vrot.slane %v265, 2
        %v267 = vadd.f32 %v265, %v266
        %v268 = vrot.slane %v267, 1
        %v269 = vadd.f32 %v267, %v268
        %v270 = vadd.f32 %v248, %v269
        %271 = vst [vmem:[#allocation2 + $0x1] sm:$0x1] %v270
        // Predicated region
        $region33: #{tpu_custom_call.1} parent=27 // pred_check
          %p272 = pneg %p74
        $region34: #{tpu_custom_call.1} parent=27 // pred_check_branch
          %274 = sbr.rel (%p272) target = $region36
        $region35: #{tpu_custom_call.1} parent=27 // pred_region
          %276 = vsyncadd [#allocation3], 0
          %s278 = sshll.u32 [#allocation2], 4
          %s279 = int_to_ptr.vmem [resolvable:$true] %s278
          %s280 = sshll.u32 %s2, 4
          %s281 = int_to_ptr.hbm [resolvable:$true] %s280
          %283 = dma.vmem_to_hbm [thread:$0]  %s279, 32, %s281, [#allocation3]
        $region36: #{tpu_custom_call.1} parent=27 // pred_fallthru
          _
        // Predicated region
        $region37: #{tpu_custom_call.1} parent=27 // pred_check
          %p284 = pneg %p74
        $region38: #{tpu_custom_call.1} parent=27 // pred_check_branch
          %286 = sbr.rel (%p284) target = $region40
        $region39: #{tpu_custom_call.1} parent=27 // pred_region
          %288 = dma.done [#allocation3], 32
        $region40: #{tpu_custom_call.1} parent=27 // pred_fallthru
          _
      $region28: #{tpu_custom_call.1} parent=5 // pred_fallthru
        _
      %p289 = scmp.le.s32.totalorder 2, %s9
      // Predicated region
      $region41: #{tpu_custom_call.1} parent=5 // pred_check
        %p290 = pneg %p289
      $region42: #{tpu_custom_call.1} parent=5 // pred_check_branch
        %292 = sbr.rel (%p290) target = $region44
      $region43: #{tpu_custom_call.1} parent=5 // pred_region
        %s293 = ssub.s32 %s9, 2
      $region44: #{tpu_custom_call.1} parent=5 // pred_fallthru
        _
    $region6: #{tpu_custom_call.1} parent=1 // loop_footer
      %s13 = sadd.s32 1, %s9
    $region7: #{tpu_custom_call.1} parent=1 // loop_footer_branch
      %8 = sbr.rel target = $region3
    $region8: #{tpu_custom_call.1} parent=1 // loop_exit
      _
    %294 = vsyncpa [#allocation3], 1
    %s295 = scalar_lea.sflag [#allocation3], 1
    %296 = vsyncpa %s295, 1

</llo_original>
